<compile_context>
chip_gen: v6e
topology: v6e:2x2x1
jax: 0.10.0
libtpu: 0.0.40
codegen_flags: <defaults>
</compile_context>

<pallas_src>
import functools
import math

import jax
import jax.numpy as jnp
from jax.experimental import pallas as pl
from jax.experimental.pallas import tpu as pltpu


_U_EPS = 1e-6


def _sample_uniform(key, shape):
    """torch.rand_like equivalent, nudged away from {0,1} so log2 stays finite."""
    return jax.random.uniform(key, shape, dtype=jnp.float32,
                              minval=_U_EPS, maxval=1.0 - _U_EPS)


def _accumulate_penalty(loc, pen_ref, row_acc, *, shift, inv_count, rows, block_rows):
    """P3 accumulator: per-tile sublane sums -> single (1,1) mean on last step."""
    i = pl.program_id(0)

    @pl.when(i == 0)
    def _():
        row_acc[...] = jnp.zeros_like(row_acc)

    l0 = jax.nn.sigmoid(loc - jnp.float32(shift))
    if rows % block_rows != 0:
        # Mask rows added by wrapper-side padding so they don't pollute the mean.
        row_ids = i * block_rows + jax.lax.broadcasted_iota(jnp.int32, l0.shape, 0)
        l0 = jnp.where(row_ids < rows, l0, 0.0)
    row_acc[...] += jnp.sum(l0, axis=0, keepdims=True)

    @pl.when(i == pl.num_programs(0) - 1)
    def _():
        pen_ref[...] = (jnp.sum(row_acc[...], axis=1, keepdims=True)
                        * jnp.float32(inv_count))


def _l0_train_kernel(loc_ref, u_ref, s_ref, pen_ref, row_acc, *,
                     inv_temp, scale, offset, shift, inv_count, rows, block_rows):
    loc = loc_ref[...]
    u = u_ref[...]
    # torch: log2(u) - log2(1-u); fused into a single log2 (one fewer EUP op).
    noise = jnp.log2(u / (1.0 - u))
    s = jax.nn.sigmoid((loc + noise) * jnp.float32(inv_temp))
    s = s * jnp.float32(scale) + jnp.float32(offset)
    s_ref[...] = jnp.clip(s, 0.0, 1.0)                       # Hardtanh(0, 1)
    _accumulate_penalty(loc, pen_ref, row_acc, shift=shift, inv_count=inv_count,
                        rows=rows, block_rows=block_rows)


def _l0_eval_kernel(loc_ref, s_ref, pen_ref, row_acc, *,
                    scale, offset, shift, inv_count, rows, block_rows):
    loc = loc_ref[...]
    s = jax.nn.sigmoid(loc) * jnp.float32(scale) + jnp.float32(offset)
    s_ref[...] = jnp.clip(s, 0.0, 1.0)                       # Hardtanh(0, 1)
    _accumulate_penalty(loc, pen_ref, row_acc, shift=shift, inv_count=inv_count,
                        rows=rows, block_rows=block_rows)


class L0HardConcrete:
    """JAX/Pallas equivalent of the PyTorch L0_Hard_Concrete module (forward only)."""

    def __init__(self, temp, inter_min, inter_max, block_rows=None):
        self.temp = float(temp)
        self.inter_min = float(inter_min)
        self.inter_max = float(inter_max)
        self.block_rows = block_rows   # optional override of the row-tile size

    @staticmethod
    def _pick_block_rows(rows, cols, requested):
        if requested is not None:
            tm = int(requested)
        else:
            # ~2 MiB f32 blocks: good pipelining on v5e/v6e and, with two
            # streams x double buffering, far below v7x's 64 MiB VMEM.
            tm = max(8, (2 * 1024 * 1024) // (4 * max(cols, 1)))
        tm = min(tm, rows)
        if tm < rows:
            tm = max(8, (tm // 8) * 8)   # sublane-aligned tile
        return tm

    def __call__(self, loc, batch=None, is_training=True, key=None):
        # `batch` is unused by the torch forward; kept for signature parity.
        loc = jnp.asarray(loc, jnp.float32)
        orig_shape = loc.shape
        loc2 = loc.reshape(1, -1) if loc.ndim == 1 else loc.reshape(-1, loc.shape[-1])
        rows, cols = loc2.shape
        n_elems = rows * cols

        tm = self._pick_block_rows(rows, cols, self.block_rows)
        grid = pl.cdiv(rows, tm)
        rows_p = grid * tm
        pad = rows_p - rows

        scale = self.inter_max - self.inter_min
        shift = self.temp * math.log2(-self.inter_min / self.inter_max)
        common = dict(scale=scale, offset=self.inter_min, shift=shift,
                      inv_count=1.0 / n_elems, rows=rows, block_rows=tm)

        block = pl.BlockSpec((tm, cols), lambda i: (i, 0))
        out_shape = (jax.ShapeDtypeStruct((rows_p, cols), jnp.float32),
                     jax.ShapeDtypeStruct((1, 1), jnp.float32))
        out_specs = (block, pl.BlockSpec((1, 1), lambda i: (0, 0)))
        scratch = [pltpu.VMEM((1, cols), jnp.float32)]
        cparams = pltpu.CompilerParams(dimension_semantics=("arbitrary",))

        loc_p = jnp.pad(loc2, ((0, pad), (0, 0))) if pad else loc2

        if is_training:
            if key is None:
                key = jax.random.PRNGKey(0)
            u = _sample_uniform(key, loc2.shape)
            u_p = jnp.pad(u, ((0, pad), (0, 0)), constant_values=0.5) if pad else u
            kernel = functools.partial(_l0_train_kernel,
                                       inv_temp=1.0 / self.temp, **common)
            cost = pl.CostEstimate(flops=12 * n_elems, transcendentals=4 * n_elems,
                                   bytes_accessed=12 * n_elems)
            s_p, pen = pl.pallas_call(
                kernel,
                grid=(grid,),
                in_specs=[block, block],
                out_specs=out_specs,
                out_shape=out_shape,
                scratch_shapes=scratch,
                compiler_params=cparams,
                cost_estimate=cost,
            )(loc_p, u_p)
        else:
            kernel = functools.partial(_l0_eval_kernel, **common)
            cost = pl.CostEstimate(flops=8 * n_elems, transcendentals=2 * n_elems,
                                   bytes_accessed=8 * n_elems)
            s_p, pen = pl.pallas_call(
                kernel,
                grid=(grid,),
                in_specs=[block],
                out_specs=out_specs,
                out_shape=out_shape,
                scratch_shapes=scratch,
                compiler_params=cparams,
                cost_estimate=cost,
            )(loc_p)

        s = s_p[:rows].reshape(orig_shape)
        return s, pen[0, 0]


if __name__ == "__main__":
    key = jax.random.PRNGKey(0)
    k_loc, k_loc2, k_u = jax.random.split(key, 3)

    mod = L0HardConcrete(temp=2.0 / 3.0, inter_min=-0.1, inter_max=1.1, block_rows=8)

    # Case 1: tile-aligned edge-logit matrix (32 x 128) -> 4 grid steps.
    loc = jax.random.normal(k_loc, (32, 128), dtype=jnp.float32)
    s_tr, pen_tr = mod(loc, batch=None, is_training=True, key=k_u)
    s_ev, pen_ev = mod(loc, batch=None, is_training=False)

    # Case 2: rows not a multiple of the row tile -> exercises padding/masking.
    loc_b = jax.random.normal(k_loc2, (20, 128), dtype=jnp.float32)
    s_ev_b, pen_ev_b = mod(loc_b, batch=None, is_training=False)

    jax.block_until_ready((s_tr, pen_tr, s_ev, pen_ev, s_ev_b, pen_ev_b))

    # ---- pure-JAX reference (mirrors the torch module, including log2) ----
    temp, imin, imax = mod.temp, mod.inter_min, mod.inter_max
    scale = imax - imin
    shift = temp * math.log2(-imin / imax)

    u = _sample_uniform(k_u, loc.shape)
    ref_s_tr = jnp.clip(
        jax.nn.sigmoid((loc + jnp.log2(u) - jnp.log2(1.0 - u)) / temp) * scale + imin,
        0.0, 1.0)
    ref_s_ev = jnp.clip(jax.nn.sigmoid(loc) * scale + imin, 0.0, 1.0)
    ref_pen = jnp.mean(jax.nn.sigmoid(loc - shift))
    ref_s_ev_b = jnp.clip(jax.nn.sigmoid(loc_b) * scale + imin, 0.0, 1.0)
    ref_pen_b = jnp.mean(jax.nn.sigmoid(loc_b - shift))

    assert s_tr.shape == loc.shape and s_ev.shape == loc.shape
    assert pen_tr.shape == () and pen_ev.shape == ()
    assert jnp.allclose(s_tr, ref_s_tr, atol=1e-4), "train gate mismatch"
    assert jnp.allclose(s_ev, ref_s_ev, atol=1e-5), "eval gate mismatch"
    assert jnp.allclose(pen_tr, ref_pen, atol=1e-4), "train penalty mismatch"
    assert jnp.allclose(pen_ev, ref_pen, atol=1e-4), "eval penalty mismatch"
    assert jnp.allclose(s_ev_b, ref_s_ev_b, atol=1e-5), "padded eval gate mismatch"
    assert jnp.allclose(pen_ev_b, ref_pen_b, atol=1e-4), "padded penalty mismatch"
    assert bool(jnp.all((s_tr >= 0.0) & (s_tr <= 1.0))), "train gate out of [0,1]"

    print("KERNEL_OK")
</pallas_src>

<mosaic_0001>
module attributes {stable_mosaic.version = 11 : i64} {
  func.func @_l0_train_kernel(%arg0: i32, %arg1: memref<8x128xf32, #tpu.memory_space<vmem>>, %arg2: memref<8x128xf32, #tpu.memory_space<vmem>>, %arg3: memref<8x128xf32, #tpu.memory_space<vmem>>, %arg4: memref<1x1xf32, #tpu.memory_space<vmem>>, %arg5: memref<1x128xf32, #tpu.memory_space<vmem>>) attributes {dimension_semantics = [#tpu.dimension_semantics<arbitrary>], iteration_bounds = array<i64: 4>, scalar_prefetch = 0 : i64, scratch_operands = 1 : i64, tpu.core_type = #tpu.core_type<tc>, window_params = [{transform_indices = @transform_0, window_bounds = array<i64: 8, 128>}, {transform_indices = @transform_1, window_bounds = array<i64: 8, 128>}, {transform_indices = @transform_2, window_bounds = array<i64: 8, 128>}, {pipeline_mode = #tpu.pipeline_mode<synchronous>, transform_indices = @transform_3, window_bounds = array<i64: 1, 1>}]} {
    %c0 = arith.constant 0 : index
    %c0_0 = arith.constant 0 : index
    %0 = vector.load %arg1[%c0, %c0_0] : memref<8x128xf32, #tpu.memory_space<vmem>>, vector<8x128xf32>
    %c0_1 = arith.constant 0 : index
    %c0_2 = arith.constant 0 : index
    %1 = vector.load %arg2[%c0_1, %c0_2] : memref<8x128xf32, #tpu.memory_space<vmem>>, vector<8x128xf32>
    %cst = arith.constant 1.000000e+00 : f32
    %2 = vector.broadcast %cst : f32 to vector<8x128xf32>
    %3 = arith.subf %2, %1 : vector<8x128xf32>
    %4 = arith.divf %1, %3 : vector<8x128xf32>
    %5 = math.log %4 : vector<8x128xf32>
    %cst_3 = arith.constant 2.000000e+00 : f32
    %6 = math.log %cst_3 : f32
    %7 = vector.broadcast %6 : f32 to vector<8x128xf32>
    %8 = arith.divf %5, %7 : vector<8x128xf32>
    %9 = arith.addf %0, %8 : vector<8x128xf32>
    %cst_4 = arith.constant 1.500000e+00 : f32
    %10 = vector.broadcast %cst_4 : f32 to vector<8x128xf32>
    %11 = arith.mulf %9, %10 : vector<8x128xf32>
    %12 = arith.negf %11 : vector<8x128xf32>
    %13 = math.exp %12 : vector<8x128xf32>
    %cst_5 = arith.constant 1.000000e+00 : f32
    %14 = vector.broadcast %cst_5 : f32 to vector<8x128xf32>
    %15 = arith.addf %14, %13 : vector<8x128xf32>
    %16 = arith.divf %14, %15 : vector<8x128xf32>
    %cst_6 = arith.constant 1.200000e+00 : f32
    %17 = vector.broadcast %cst_6 : f32 to vector<8x128xf32>
    %18 = arith.mulf %16, %17 : vector<8x128xf32>
    %cst_7 = arith.constant -1.000000e-01 : f32
    %19 = vector.broadcast %cst_7 : f32 to vector<8x128xf32>
    %20 = arith.addf %18, %19 : vector<8x128xf32>
    %cst_8 = arith.constant 0.000000e+00 : f32
    %cst_9 = arith.constant 1.000000e+00 : f32
    %21 = vector.broadcast %cst_8 : f32 to vector<8x128xf32>
    %22 = arith.maximumf %21, %20 : vector<8x128xf32>
    %23 = vector.broadcast %cst_9 : f32 to vector<8x128xf32>
    %24 = arith.minimumf %23, %22 : vector<8x128xf32>
    %c0_10 = arith.constant 0 : index
    %c0_11 = arith.constant 0 : index
    %25 = vector.load %arg3[%c0_10, %c0_11] : memref<8x128xf32, #tpu.memory_space<vmem>>, vector<8x128xf32>
    tpu.vector_store %arg3[%c0_10, %c0_11], %24 {strides = array<i32>} : memref<8x128xf32, #tpu.memory_space<vmem>>, vector<8x128xf32>,
    %c0_i32 = arith.constant 0 : i32
    %26 = arith.cmpi eq, %arg0, %c0_i32 : i32
    %27 = arith.extui %26 : i1 to i32
    %c0_i32_12 = arith.constant 0 : i32
    %28 = arith.cmpi ne, %27, %c0_i32_12 : i32
    scf.if %28 {
      %cst_21 = arith.constant 0.000000e+00 : f32
      %44 = vector.broadcast %cst_21 : f32 to vector<1x128xf32>
      %c0_22 = arith.constant 0 : index
      %c0_23 = arith.constant 0 : index
      %45 = vector.load %arg5[%c0_22, %c0_23] : memref<1x128xf32, #tpu.memory_space<vmem>>, vector<1x128xf32>
      tpu.vector_store %arg5[%c0_22, %c0_23], %44 {strides = array<i32>} : memref<1x128xf32, #tpu.memory_space<vmem>>, vector<1x128xf32>,
    } else {
    }
    %cst_13 = arith.constant -2.30628777 : f32
    %29 = vector.broadcast %cst_13 : f32 to vector<8x128xf32>
    %30 = arith.subf %0, %29 : vector<8x128xf32>
    %31 = arith.negf %30 : vector<8x128xf32>
    %32 = math.exp %31 : vector<8x128xf32>
    %cst_14 = arith.constant 1.000000e+00 : f32
    %33 = vector.broadcast %cst_14 : f32 to vector<8x128xf32>
    %34 = arith.addf %33, %32 : vector<8x128xf32>
    %35 = arith.divf %33, %34 : vector<8x128xf32>
    %c0_15 = arith.constant 0 : index
    %c0_16 = arith.constant 0 : index
    %36 = vector.load %arg5[%c0_15, %c0_16] : memref<1x128xf32, #tpu.memory_space<vmem>>, vector<1x128xf32>
    %cst_17 = arith.constant dense<0.000000e+00> : vector<128xf32>
    %37 = vector.multi_reduction <add>, %35, %cst_17 [0] : vector<8x128xf32> to vector<128xf32>
    %38 = vector.shape_cast %37 : vector<128xf32> to vector<1x128xf32>
    %39 = arith.addf %36, %38 : vector<1x128xf32>
    %c0_18 = arith.constant 0 : index
    %c0_19 = arith.constant 0 : index
    %40 = vector.load %arg5[%c0_18, %c0_19] : memref<1x128xf32, #tpu.memory_space<vmem>>, vector<1x128xf32>
    tpu.vector_store %arg5[%c0_18, %c0_19], %39 {strides = array<i32>} : memref<1x128xf32, #tpu.memory_space<vmem>>, vector<1x128xf32>,
    %c3_i32 = arith.constant 3 : i32
    %41 = arith.cmpi eq, %arg0, %c3_i32 : i32
    %42 = arith.extui %41 : i1 to i32
    %c0_i32_20 = arith.constant 0 : i32
    %43 = arith.cmpi ne, %42, %c0_i32_20 : i32
    scf.if %43 {
      %c0_21 = arith.constant 0 : index
      %c0_22 = arith.constant 0 : index
      %44 = vector.load %arg5[%c0_21, %c0_22] : memref<1x128xf32, #tpu.memory_space<vmem>>, vector<1x128xf32>
      %cst_23 = arith.constant dense<0.000000e+00> : vector<1xf32>
      %45 = vector.multi_reduction <add>, %44, %cst_23 [1] : vector<1x128xf32> to vector<1xf32>
      %46 = vector.shape_cast %45 : vector<1xf32> to vector<1x1xf32>
      %cst_24 = arith.constant 2.44140625E-4 : f32
      %47 = vector.broadcast %cst_24 : f32 to vector<1x1xf32>
      %48 = arith.mulf %46, %47 : vector<1x1xf32>
      %c0_25 = arith.constant 0 : index
      %c0_26 = arith.constant 0 : index
      %49 = vector.load %arg4[%c0_25, %c0_26] : memref<1x1xf32, #tpu.memory_space<vmem>>, vector<1x1xf32>
      tpu.vector_store %arg4[%c0_25, %c0_26], %48 {strides = array<i32>} : memref<1x1xf32, #tpu.memory_space<vmem>>, vector<1x1xf32>,
    } else {
    }
    return
  }
  func.func @transform_0(%arg0: i32) -> (i32, i32) {
    %c0_i32 = arith.constant 0 : i32
    %c0_i32_0 = arith.constant 0 : i32
    return %arg0, %c0_i32 : i32, i32
  }
  func.func @transform_1(%arg0: i32) -> (i32, i32) {
    %c0_i32 = arith.constant 0 : i32
    %c0_i32_0 = arith.constant 0 : i32
    return %arg0, %c0_i32 : i32, i32
  }
  func.func @transform_2(%arg0: i32) -> (i32, i32) {
    %c0_i32 = arith.constant 0 : i32
    %c0_i32_0 = arith.constant 0 : i32
    return %arg0, %c0_i32 : i32, i32
  }
  func.func @transform_3(%arg0: i32) -> (i32, i32) {
    %c0_i32 = arith.constant 0 : i32
    %c0_i32_0 = arith.constant 0 : i32
    %c0_i32_1 = arith.constant 0 : i32
    return %c0_i32, %c0_i32_0 : i32, i32
  }
}

</mosaic_0001>

<llo_original>
// kernel: tpu_custom_call.1
$region0: #{tpu_custom_call.1}
  #allocation0 [shape = 'u32[]', space=smem, size = 0x4, offset = 0x4, fixed_abs, tag = 'smem constant byte address 0x4 - core index']
  #allocation1 [shape = 'u32[144,128]{1,0:T(1,128)}', space=vmem, size = 0x12000, scoped, tag = 'internal scratch']
  #allocation2 [shape = 'f32[1,128]{1,0:T(1,128)}', space=vmem, size = 0x200, scoped, tag = 'scratch operand']
  %s0 = inlined_call_operand.hbm [shape: f32[32,128], index: 0, kind: input, shape index: {}]
  %s1 = inlined_call_operand.hbm [shape: f32[32,128], index: 1, kind: input, shape index: {}]
  %s2 = inlined_call_operand.hbm [shape: f32[32,128], index: 2, kind: output, shape index: {0}]
  %s3 = inlined_call_operand.hbm [shape: f32[1,1], index: 3, kind: output, shape index: {1}]
  %4 = xla_tuple %s2, %s3
  %s5 = sld [smem:[#allocation0]]
  $region65: #{tpu_custom_call.1} parent=0
    _
  %s7 = ssub.s32 1, %s5
  %s8 = scalar_select 0, %s7, %s5
  $region1: #{tpu_custom_call.1} parent=0
    #allocation3 [shape = 'u8[8192]{0}', space=vmem, size = 0x2000, scoped, tag = 'input window, operand 0']
    #allocation4 [shape = 's32[2]{0}', space=sflag, size = 0x8, scoped, tag = 'scoped memory for tpu_custom_call.1']
    #allocation5 [shape = 's32[2]{0}', space=sflag, size = 0x8, scoped, tag = 'scoped memory for tpu_custom_call.1']
    #allocation6 [shape = 'u8[8192]{0}', space=vmem, size = 0x2000, scoped, tag = 'input window, operand 1']
    #allocation7 [shape = 's32[2]{0}', space=sflag, size = 0x8, scoped, tag = 'scoped memory for tpu_custom_call.1']
    #allocation8 [shape = 'u8[8192]{0}', space=vmem, size = 0x2000, scoped, tag = 'output window, operand 0']
    #allocation9 [shape = 'u8[512]{0}', space=vmem, size = 0x400, scoped, tag = 'output window, operand 1, single buffered']
    #allocation10 [shape = 's32[1]{0}', space=sflag, size = 0x4, scoped, tag = 'scoped memory for tpu_custom_call.1']
    %9 = vsyncpa [#allocation4], 0
    %s10 = scalar_lea.sflag [#allocation4], 1
    %11 = vsyncpa %s10, 0
    %12 = vsyncpa [#allocation7], 0
    %s13 = scalar_lea.sflag [#allocation7], 1
    %14 = vsyncpa %s13, 0
    %15 = vsyncpa [#allocation5], 0
    %s16 = scalar_lea.sflag [#allocation5], 1
    %17 = vsyncpa %s16, 0
    %18 = vsyncpa [#allocation10], 0
    loop: start=0, step=1, limit=6
    $region2: #{tpu_custom_call.1} parent=1 // loop_pre_header
      _
    $region3: #{tpu_custom_call.1} parent=1 // loop_header
      %s20 = sphi 0, %s24
      %p21 = scmp.ge.s32.totalorder %s20, 6
      %s30 = sphi 0, %s32
      %s33 = sphi 0, %s30
      %s34 = sphi 0, %s33
      %s50 = sphi 0, %s34
      %s56 = sphi 0, %s58
      %s59 = sphi 0, %s56
      %s60 = sphi 0, %s59
      %s76 = sphi 0, %s60
      %s82 = sphi 0, %s84
      %s85 = sphi 0, %s82
      %s86 = sphi 0, %s85
      %s102 = sphi 0, %s86
      %s106 = sphi 0, %s106
      %s108 = sphi 0, %s106
      %s109 = sphi 0, %s108
      %s123 = sphi 0, %s109
    $region4: #{tpu_custom_call.1} parent=1 // loop_header_branch
      %23 = sbr.rel (%p21) target = $region8
    $region5: #{tpu_custom_call.1} parent=1 // loop_body
      %s25 = ssub.s32 %s20, 1
      %s26 = ssub.s32 %s20, 2
      %s27 = sadd.s32 %s20, 1
      %s28 = ssub.s32 %s20, %s27
      %p29 = scmp.eq.s32.totalorder %s28, 0
      %s31 = sadd.s32 %s30, 1
      %s32 = scalar_select %p29, %s30, %s31
      %p35 = pneg %p29
      %p36 = scmp.eq.s32.totalorder %s20, 3
      %p37 = por %p35, %p36
      %p38 = scmp.ne.s32.totalorder %s30, %s33
      %p39 = scmp.eq.s32.totalorder %s20, 0
      %p40 = por %p38, %p39
      %p41 = scmp.ne.s32.totalorder %s30, %s33
      %p42 = scmp.eq.s32.totalorder %s25, 3
      %p43 = por %p41, %p42
      %p44 = scmp.ne.s32.totalorder %s33, %s34
      %p45 = scmp.eq.s32.totalorder %s25, 0
      %p46 = por %p44, %p45
      %p47 = scmp.ne.s32.totalorder %s33, %s34
      %p48 = scmp.eq.s32.totalorder %s26, 3
      %p49 = por %p47, %p48
      %p51 = scmp.ne.s32.totalorder %s34, %s50
      %p52 = scmp.eq.s32.totalorder %s26, 0
      %p53 = por %p51, %p52
      %s54 = ssub.s32 %s20, %s27
      %p55 = scmp.eq.s32.totalorder %s54, 0
      %s57 = sadd.s32 %s56, 1
      %s58 = scalar_select %p55, %s56, %s57
      %p61 = pneg %p55
      %p62 = scmp.eq.s32.totalorder %s20, 3
      %p63 = por %p61, %p62
      %p64 = scmp.ne.s32.totalorder %s56, %s59
      %p65 = scmp.eq.s32.totalorder %s20, 0
      %p66 = por %p64, %p65
      %p67 = scmp.ne.s32.totalorder %s56, %s59
      %p68 = scmp.eq.s32.totalorder %s25, 3
      %p69 = por %p67, %p68
      %p70 = scmp.ne.s32.totalorder %s59, %s60
      %p71 = scmp.eq.s32.totalorder %s25, 0
      %p72 = por %p70, %p71
      %p73 = scmp.ne.s32.totalorder %s59, %s60
      %p74 = scmp.eq.s32.totalorder %s26, 3
      %p75 = por %p73, %p74
      %p77 = scmp.ne.s32.totalorder %s60, %s76
      %p78 = scmp.eq.s32.totalorder %s26, 0
      %p79 = por %p77, %p78
      %s80 = ssub.s32 %s20, %s27
      %p81 = scmp.eq.s32.totalorder %s80, 0
      %s83 = sadd.s32 %s82, 1
      %s84 = scalar_select %p81, %s82, %s83
      %p87 = pneg %p81
      %p88 = scmp.eq.s32.totalorder %s20, 3
      %p89 = por %p87, %p88
      %p90 = scmp.ne.s32.totalorder %s82, %s85
      %p91 = scmp.eq.s32.totalorder %s20, 0
      %p92 = por %p90, %p91
      %p93 = scmp.ne.s32.totalorder %s82, %s85
      %p94 = scmp.eq.s32.totalorder %s25, 3
      %p95 = por %p93, %p94
      %p96 = scmp.ne.s32.totalorder %s85, %s86
      %p97 = scmp.eq.s32.totalorder %s25, 0
      %p98 = por %p96, %p97
      %p99 = scmp.ne.s32.totalorder %s85, %s86
      %p100 = scmp.eq.s32.totalorder %s26, 3
      %p101 = por %p99, %p100
      %p103 = scmp.ne.s32.totalorder %s86, %s102
      %p104 = scmp.eq.s32.totalorder %s26, 0
      %p105 = por %p103, %p104
      %s107 = sadd.s32 %s106, 1
      %p110 = scmp.eq.s32.totalorder %s20, 3
      %p111 = scmp.ne.s32.totalorder %s106, %s108
      %p112 = scmp.eq.s32.totalorder %s20, 0
      %p113 = por %p111, %p112
      %p114 = scmp.ne.s32.totalorder %s106, %s108
      %p115 = scmp.eq.s32.totalorder %s25, 3
      %p116 = por %p114, %p115
      %p117 = scmp.ne.s32.totalorder %s108, %s109
      %p118 = scmp.eq.s32.totalorder %s25, 0
      %p119 = por %p117, %p118
      %p120 = scmp.ne.s32.totalorder %s108, %s109
      %p121 = scmp.eq.s32.totalorder %s26, 3
      %p122 = por %p120, %p121
      %p124 = scmp.ne.s32.totalorder %s109, %s123
      %p125 = scmp.eq.s32.totalorder %s26, 0
      %p126 = por %p124, %p125
      %p127 = scmp.le.s32.totalorder 1, %s20
      %p128 = scmp.lt.s32.totalorder %s20, 5
      %p129 = pnand %p127, %p128
      %p130 = pneg %p129
      // Predicated region
      $region9: #{tpu_custom_call.1} parent=5 // pred_check
        _
      $region10: #{tpu_custom_call.1} parent=5 // pred_check_branch
        %132 = sbr.rel (%p129) target = $region12
      $region11: #{tpu_custom_call.1} parent=5 // pred_region
        %s133 = ssub.s32 %s20, 1
      $region12: #{tpu_custom_call.1} parent=5 // pred_fallthru
        _
      %p134 = scmp.lt.s32.totalorder %s20, 4
      // Predicated region
      $region13: #{tpu_custom_call.1} parent=5 // pred_check
        %p135 = pneg %p134
      $region14: #{tpu_custom_call.1} parent=5 // pred_check_branch
        %137 = sbr.rel (%p135) target = $region16
      $region15: #{tpu_custom_call.1} parent=5 // pred_region
        // Predicated region
        $region17: #{tpu_custom_call.1} parent=15 // pred_check
          %p138 = pneg %p40
        $region18: #{tpu_custom_call.1} parent=15 // pred_check_branch
          %140 = sbr.rel (%p138) target = $region20
        $region19: #{tpu_custom_call.1} parent=15 // pred_region
          %s141 = sand.u32 %s30, 1
          %s142 = scalar_lea.sflag [#allocation4], %s141
          %s143 = sand.u32 %s30, 1
          %s144 = smul.addr %s143, 8
          %s145 = scalar_lea.vmem [#allocation3], %s144
          %s147 = ssub.s32 128, 128
          %148 = vsyncadd %s142, %s147
          %s149 = smul.addr %s20, 128
          %s150 = scalar_lea.hbm %s0, %s149
          %s152 = sshll.u32 %s145, 4
          %s153 = int_to_ptr.vmem [resolvable:$true] %s152
          %155 = dma.hbm_to_vmem [thread:$0]  %s150, 128, %s153, %s142
        $region20: #{tpu_custom_call.1} parent=15 // pred_fallthru
          _
        // Predicated region
        $region21: #{tpu_custom_call.1} parent=15 // pred_check
          %p156 = pneg %p66
        $region22: #{tpu_custom_call.1} parent=15 // pred_check_branch
          %158 = sbr.rel (%p156) target = $region24
        $region23: #{tpu_custom_call.1} parent=15 // pred_region
          %s159 = sand.u32 %s56, 1
          %s160 = scalar_lea.sflag [#allocation7], %s159
          %s161 = sand.u32 %s56, 1
          %s162 = smul.addr %s161, 8
          %s163 = scalar_lea.vmem [#allocation6], %s162
          %s165 = ssub.s32 128, 128
          %166 = vsyncadd %s160, %s165
          %s167 = smul.addr %s20, 128
          %s168 = scalar_lea.hbm %s1, %s167
          %s170 = sshll.u32 %s163, 4
          %s171 = int_to_ptr.vmem [resolvable:$true] %s170
          %173 = dma.hbm_to_vmem [thread:$0]  %s168, 128, %s171, %s160
        $region24: #{tpu_custom_call.1} parent=15 // pred_fallthru
          _
      $region16: #{tpu_custom_call.1} parent=5 // pred_fallthru
        _
      %p174 = scmp.le.s32.totalorder 1, %s20
      %p175 = scmp.lt.s32.totalorder %s20, 5
      %p176 = pnand %p174, %p175
      %p177 = pneg %p176
      // Predicated region
      $region25: #{tpu_custom_call.1} parent=5 // pred_check
        _
      $region26: #{tpu_custom_call.1} parent=5 // pred_check_branch
        %179 = sbr.rel (%p176) target = $region28
      $region27: #{tpu_custom_call.1} parent=5 // pred_region
        %s180 = ssub.s32 %s20, 1
        %s181 = sand.u32 %s33, 1
        %s182 = scalar_lea.sflag [#allocation4], %s181
        %s183 = sand.u32 %s33, 1
        %s184 = smul.addr %s183, 8
        %s185 = scalar_lea.vmem [#allocation3], %s184
        // Predicated region
        $region29: #{tpu_custom_call.1} parent=27 // pred_check
          %p186 = pneg %p46
        $region30: #{tpu_custom_call.1} parent=27 // pred_check_branch
          %188 = sbr.rel (%p186) target = $region32
        $region31: #{tpu_custom_call.1} parent=27 // pred_region
          %189 = dma.done %s182, 128
        $region32: #{tpu_custom_call.1} parent=27 // pred_fallthru
          _
        %s190 = sand.u32 %s59, 1
        %s191 = scalar_lea.sflag [#allocation7], %s190
        %s192 = sand.u32 %s59, 1
        %s193 = smul.addr %s192, 8
        %s194 = scalar_lea.vmem [#allocation6], %s193
        // Predicated region
        $region33: #{tpu_custom_call.1} parent=27 // pred_check
          %p195 = pneg %p72
        $region34: #{tpu_custom_call.1} parent=27 // pred_check_branch
          %197 = sbr.rel (%p195) target = $region36
        $region35: #{tpu_custom_call.1} parent=27 // pred_region
          %198 = dma.done %s191, 128
        $region36: #{tpu_custom_call.1} parent=27 // pred_fallthru
          _
        %s199 = sand.u32 %s33, 1
        %s200 = scalar_lea.sflag [#allocation4], %s199
        %s201 = sand.u32 %s33, 1
        %s202 = smul.addr %s201, 8
        %s203 = scalar_lea.vmem [#allocation3], %s202
        %p204 = pneg %p46
        %p205 = pneg %p43
        %s206 = sand.u32 %s59, 1
        %s207 = scalar_lea.sflag [#allocation7], %s206
        %s208 = sand.u32 %s59, 1
        %s209 = smul.addr %s208, 8
        %s210 = scalar_lea.vmem [#allocation6], %s209
        %p211 = pneg %p72
        %p212 = pneg %p69
        %p213 = pneg %p98
        %p214 = pneg %p95
        %s215 = sand.u32 %s85, 1
        %s216 = scalar_lea.sflag [#allocation5], %s215
        %s217 = sand.u32 %s85, 1
        %s218 = smul.addr %s217, 8
        %s219 = scalar_lea.vmem [#allocation8], %s218
        %p220 = pneg %p119
        %p221 = pneg %p116
        %v222 = vld [vmem:[%s185] sm:$0xff]
        %v223 = vld [vmem:[%s194] sm:$0xff]
        %v224 = vsub.f32 1.0, %v223
        %v225 = vrcp.pop %v224
        %v226 = vmul.f32 %v223, %v225
        %v227 = vlog2.pop %v226
        %v228 = vmul.f32 %v227, 0.6931472
        %v229 = vrcp.pop 0.6931472
        %v230 = vmul.f32 %v228, %v229
        %v231 = vadd.f32 %v222, %v230
        %v232 = vmul.f32 %v231, 1.5
        %v233 = vxor.u32 %v232, 2147483648
        %v234 = vmul.f32 %v233, 1.442695
        %v235 = vpow.pop %v234
        %v236 = vadd.f32 %v235, 1.0
        %v237 = vrcp.pop %v236
        %v238 = vmul.f32 1.0, %v237
        %v239 = vmul.f32 %v238, 1.2
        %v240 = vadd.f32 %v239, -0.1
        %v241 = vmax.f32 %v240, 0.0
        %v242 = vmin.f32 %v241, 1.0
        %243 = vst [vmem:[%s219] sm:$0xff] %v242
        %p244 = scmp.eq.s32.totalorder %s25, 0
        // Predicated region
        $region37: #{tpu_custom_call.1} parent=27 // pred_check
          %p245 = pneg %p244
        $region38: #{tpu_custom_call.1} parent=27 // pred_check_branch
          %247 = sbr.rel (%p245) target = $region40
        $region39: #{tpu_custom_call.1} parent=27 // pred_region
          %248 = vst [vmem:[#allocation2] sm:$0x1] 0.0
        $region40: #{tpu_custom_call.1} parent=27 // pred_fallthru
          _
        %v249 = vsub.f32 %v222, -2.3062878
        %v250 = vxor.u32 %v249, 2147483648
        %v251 = vmul.f32 %v250, 1.442695
        %v252 = vpow.pop %v251
        %v253 = vadd.f32 %v252, 1.0
        %v254 = vrcp.pop %v253
        %v255 = vmul.f32 1.0, %v254
        %v256 = vld [vmem:[#allocation2] sm:$0x1]
        %v257 = vrot.slane %v255, 4
        %v258 = vadd.f32 %v255, %v257
        %v259 = vrot.slane %v258, 2
        %v260 = vadd.f32 %v258, %v259
        %v261 = vrot.slane %v260, 1
        %v262 = vadd.f32 %v260, %v261
        %v263 = vadd.f32 %v256, %v262
        %264 = vst [vmem:[#allocation2] sm:$0x1] %v263
        %p265 = scmp.eq.s32.totalorder %s25, 3
        // Predicated region
        $region41: #{tpu_custom_call.1} parent=27 // pred_check
          %p266 = pneg %p265
        $region42: #{tpu_custom_call.1} parent=27 // pred_check_branch
          %268 = sbr.rel (%p266) target = $region44
        $region43: #{tpu_custom_call.1} parent=27 // pred_region
          %v269 = vld [vmem:[#allocation2] sm:$0x1]
          %vm270 = vcmask 1040384
          %v271 = vsel %vm270, %v269, 0.0
          %272 = vadd.xlane.f32.xlu0 %v271
          %v273 = vpop.xlane.xlu0 %272
          %v274 = vmul.f32 %v273, 0.00024414063
          %vm275 = vcmask 0
          %276 = vst.msk [vmem:[#allocation9] sm:$0x1] %vm275, %v274
        $region44: #{tpu_custom_call.1} parent=27 // pred_fallthru
          _
        %s277 = sand.u32 %s85, 1
        %s278 = scalar_lea.sflag [#allocation5], %s277
        %s279 = sand.u32 %s85, 1
        %s280 = smul.addr %s279, 8
        %s281 = scalar_lea.vmem [#allocation8], %s280
        // Predicated region
        $region45: #{tpu_custom_call.1} parent=27 // pred_check
          %p282 = pneg %p95
        $region46: #{tpu_custom_call.1} parent=27 // pred_check_branch
          %284 = sbr.rel (%p282) target = $region48
        $region47: #{tpu_custom_call.1} parent=27 // pred_region
          %s286 = ssub.s32 128, 128
          %287 = vsyncadd %s278, %s286
          %s288 = smul.addr %s25, 128
          %s289 = scalar_lea.hbm %s2, %s288
          %s291 = sshll.u32 %s281, 4
          %s292 = int_to_ptr.vmem [resolvable:$true] %s291
          %294 = dma.vmem_to_hbm [thread:$0]  %s292, 128, %s289, %s278
        $region48: #{tpu_custom_call.1} parent=27 // pred_fallthru
          _
        // Predicated region
        $region49: #{tpu_custom_call.1} parent=27 // pred_check
          %p295 = pneg %p116
        $region50: #{tpu_custom_call.1} parent=27 // pred_check_branch
          %297 = sbr.rel (%p295) target = $region52
        $region51: #{tpu_custom_call.1} parent=27 // pred_region
          %s299 = ssub.s32 16, 16
          %300 = vsyncadd [#allocation10], %s299
          %s302 = sshll.u32 [#allocation9], 4
          %s303 = int_to_ptr.vmem [resolvable:$true] %s302
          %305 = dma.vmem_to_hbm [thread:$0]  %s303, 16, %s3, [#allocation10]
        $region52: #{tpu_custom_call.1} parent=27 // pred_fallthru
          _
        // Predicated region
        $region53: #{tpu_custom_call.1} parent=27 // pred_check
          %p306 = pneg %p116
        $region54: #{tpu_custom_call.1} parent=27 // pred_check_branch
          %308 = sbr.rel (%p306) target = $region56
        $region55: #{tpu_custom_call.1} parent=27 // pred_region
          %309 = dma.done [#allocation10], 16
        $region56: #{tpu_custom_call.1} parent=27 // pred_fallthru
          _
      $region28: #{tpu_custom_call.1} parent=5 // pred_fallthru
        _
      %p310 = scmp.le.s32.totalorder 2, %s20
      // Predicated region
      $region57: #{tpu_custom_call.1} parent=5 // pred_check
        %p311 = pneg %p310
      $region58: #{tpu_custom_call.1} parent=5 // pred_check_branch
        %313 = sbr.rel (%p311) target = $region60
      $region59: #{tpu_custom_call.1} parent=5 // pred_region
        %s314 = ssub.s32 %s20, 2
        // Predicated region
        $region61: #{tpu_custom_call.1} parent=59 // pred_check
          %p315 = pneg %p101
        $region62: #{tpu_custom_call.1} parent=59 // pred_check_branch
          %317 = sbr.rel (%p315) target = $region64
        $region63: #{tpu_custom_call.1} parent=59 // pred_region
          %s318 = sand.u32 %s86, 1
          %s319 = scalar_lea.sflag [#allocation5], %s318
          %s320 = sand.u32 %s86, 1
          %s321 = smul.addr %s320, 8
          %s322 = scalar_lea.vmem [#allocation8], %s321
          %323 = dma.done %s319, 128
        $region64: #{tpu_custom_call.1} parent=59 // pred_fallthru
          _
      $region60: #{tpu_custom_call.1} parent=5 // pred_fallthru
        _
    $region6: #{tpu_custom_call.1} parent=1 // loop_footer
      %s24 = sadd.s32 1, %s20
    $region7: #{tpu_custom_call.1} parent=1 // loop_footer_branch
      %19 = sbr.rel target = $region3
    $region8: #{tpu_custom_call.1} parent=1 // loop_exit
      _
    %324 = vsyncpa [#allocation4], 1
    %s325 = scalar_lea.sflag [#allocation4], 1
    %326 = vsyncpa %s325, 1
    %327 = vsyncpa [#allocation7], 1
    %s328 = scalar_lea.sflag [#allocation7], 1
    %329 = vsyncpa %s328, 1
    %330 = vsyncpa [#allocation5], 1
    %s331 = scalar_lea.sflag [#allocation5], 1
    %332 = vsyncpa %s331, 1
    %333 = vsyncpa [#allocation10], 1

</llo_original>
